<compile_context>
chip_gen: v7x
topology: tpu7x:2x2x1
jax: 0.10.0
libtpu: 0.0.40
codegen_flags: <defaults>
</compile_context>

<pallas_src>
import jax
import jax.numpy as jnp
from jax.experimental import pallas as pl
from jax.experimental.pallas import tpu as pltpu

LANES = 128
SUBLANES = 8


def _lambda_kernel_factory(f, compute_dtype=None):
    def kernel(x_ref, o_ref):
        x = x_ref[...]
        if compute_dtype is not None:
            x = x.astype(compute_dtype)
        o_ref[...] = f(x).astype(o_ref.dtype)
    return kernel


def _chip_config():
    """Return (tensorcores_per_chip, target_block_bytes, vmem_limit_bytes)."""
    kind = ""
    try:
        kind = jax.devices()[0].device_kind.lower()
    except Exception:
        pass
    if ("v5 lite" in kind) or ("v5e" in kind) or ("v5lite" in kind):
        # v5e: 1 TC, 128 MiB physical VMEM, 16 MiB scoped default -> raise it.
        return 1, 3 << 20, 32 << 20
    if "v6" in kind:
        # v6e: 1 TC, 128 MiB physical VMEM.
        return 1, 6 << 20, 64 << 20
    if "7" in kind:
        # v7x: 2 TCs per chip, 64 MiB VMEM per TC (32 MiB scoped default).
        return 2, 4 << 20, 32 << 20
    # Unknown generation: conservative settings valid everywhere.
    return 1, 3 << 20, 32 << 20


def make_lambda(f, *, compute_dtype=None, donate_input=True,
                target_block_bytes=None, max_row_width=16384):
    """Returns a callable equivalent to PyTorch Lambda(f).forward."""

    kernel = _lambda_kernel_factory(f, compute_dtype)
    num_tc, default_block_bytes, vmem_limit = _chip_config()
    block_bytes = target_block_bytes or default_block_bytes
    cparams = pltpu.CompilerParams(dimension_semantics=("parallel",),
                                   vmem_limit_bytes=vmem_limit)

    def apply(x):
        orig_shape = x.shape
        total = x.size

        out_struct = jax.eval_shape(
            f, jax.ShapeDtypeStruct(orig_shape, x.dtype))
        if tuple(out_struct.shape) != tuple(orig_shape):
            raise ValueError(
                "Lambda Pallas kernel requires a shape-preserving elementwise "
                f"f; got {orig_shape} -> {out_struct.shape}")
        out_dtype = out_struct.dtype

        if total == 0:
            return jnp.zeros(orig_shape, out_dtype)

        itemsize = max(
            jnp.dtype(x.dtype).itemsize,
            jnp.dtype(out_dtype).itemsize,
            jnp.dtype(compute_dtype).itemsize if compute_dtype is not None else 0,
        )
        x_flat = x.reshape(-1)
        can_alias = donate_input and out_dtype == x.dtype

        # ------------------------------------------------------------------
        # Fast path: total is a multiple of 128 -> lane-dense (rows, C) slab.
        # ------------------------------------------------------------------
        if total % LANES == 0:
            # Widen C (unmasked vst + long contiguous DMA rows), but keep
            # rows >= 8 so every (8,128) vreg carries 8 valid sublanes.
            C = LANES
            while (C * 2 <= max_row_width and total % (C * 2) == 0
                   and total // (C * 2) >= SUBLANES):
                C *= 2
            rows = total // C

            tr = max(1, block_bytes // (C * itemsize))
            tr = max(SUBLANES, (tr // SUBLANES) * SUBLANES)
            if tr >= rows:
                # Whole array fits in one block.
                tr = rows
                if num_tc >= 2:
                    # v7x: split so each TensorCore gets >=2 blocks when the
                    # row count permits; restores double-buffering per core.
                    if rows >= 4 * SUBLANES:
                        tr = pl.cdiv(pl.cdiv(rows, 4), SUBLANES) * SUBLANES
                    elif rows >= 2 * SUBLANES:
                        tr = pl.cdiv(pl.cdiv(rows, 2), SUBLANES) * SUBLANES
            grid_m = pl.cdiv(rows, tr)

            out2d = pl.pallas_call(
                kernel,
                out_shape=jax.ShapeDtypeStruct((rows, C), out_dtype),
                grid_spec=pltpu.PrefetchScalarGridSpec(
                    num_scalar_prefetch=0,
                    grid=(grid_m,),
                    in_specs=[pl.BlockSpec((tr, C), lambda i: (i, 0))],
                    out_specs=pl.BlockSpec((tr, C), lambda i: (i, 0)),
                ),
                compiler_params=cparams,
                input_output_aliases={0: 0} if can_alias else {},
            )(x_flat.reshape(rows, C))
            return out2d.reshape(orig_shape)

        # ------------------------------------------------------------------
        # Ragged total (not a multiple of 128).
        # Small/medium: single (1, total) block -- block shape equals the
        # full array dims so no 128-alignment is needed, and there are zero
        # pad/slice HBM passes.  A (1, N) tile pads to 8 sublanes in VMEM, so
        # budget with an 8x factor.
        # ------------------------------------------------------------------
        if total * itemsize * SUBLANES <= block_bytes:
            out2d = pl.pallas_call(
                kernel,
                out_shape=jax.ShapeDtypeStruct((1, total), out_dtype),
                grid_spec=pltpu.PrefetchScalarGridSpec(
                    num_scalar_prefetch=0,
                    grid=(1,),
                    in_specs=[pl.BlockSpec((1, total), lambda i: (0, 0))],
                    out_specs=pl.BlockSpec((1, total), lambda i: (0, 0)),
                ),
                compiler_params=pltpu.CompilerParams(
                    dimension_semantics=("arbitrary",),
                    vmem_limit_bytes=vmem_limit),
                input_output_aliases={0: 0} if can_alias else {},
            )(x_flat.reshape(1, total))
            return out2d.reshape(orig_shape)

        # TODO(synk): huge ragged totals still take a pad + slice fallback
        # (two extra HBM passes); a prefix-kernel + masked-tail store would
        # remove them and avoid running f on zero padding.
        C = LANES
        rows = -(-total // C)
        rows = -(-rows // SUBLANES) * SUBLANES
        x_pad = jnp.pad(x_flat, (0, rows * C - total))
        tr = max(SUBLANES, ((block_bytes // (C * itemsize)) // SUBLANES) * SUBLANES)
        tr = min(tr, rows)
        grid_m = pl.cdiv(rows, tr)
        out2d = pl.pallas_call(
            kernel,
            out_shape=jax.ShapeDtypeStruct((rows, C), out_dtype),
            grid_spec=pltpu.PrefetchScalarGridSpec(
                num_scalar_prefetch=0,
                grid=(grid_m,),
                in_specs=[pl.BlockSpec((tr, C), lambda i: (i, 0))],
                out_specs=pl.BlockSpec((tr, C), lambda i: (i, 0)),
            ),
            compiler_params=cparams,
        )(x_pad.reshape(rows, C))
        return out2d.reshape(-1)[:total].reshape(orig_shape)

    return apply


if __name__ == "__main__":
    key = jax.random.PRNGKey(0)
    k1, k2, k3 = jax.random.split(key, 3)

    # Lambda(f) with f = tanh
    lambda_tanh = make_lambda(jnp.tanh)

    # 1) small NCHW input consistent with generic Lambda usage
    x1 = jax.random.normal(k1, (2, 4, 16, 16), dtype=jnp.float32)
    ref1 = jnp.tanh(x1)
    y1 = jax.block_until_ready(lambda_tanh(x1))
    assert y1.shape == x1.shape and y1.dtype == x1.dtype
    assert jnp.allclose(y1, ref1, atol=1e-6, rtol=1e-6)

    # 2) larger aligned input -> wide lane-dense rows (rows kept >= 8)
    x2 = jax.random.normal(k2, (64, 4096), dtype=jnp.float32)
    ref2 = jnp.tanh(x2)
    y2 = jax.block_until_ready(lambda_tanh(x2))
    assert jnp.allclose(y2, ref2, atol=1e-6, rtol=1e-6)

    # 3) ragged total (105 elements, not a multiple of 128) -> single
    #    full-dims block, no pad/slice HBM passes
    x3 = jax.random.normal(k3, (3, 5, 7), dtype=jnp.float32)
    ref3 = jnp.tanh(x3)
    y3 = jax.block_until_ready(lambda_tanh(x3))
    assert y3.shape == x3.shape
    assert jnp.allclose(y3, ref3, atol=1e-6, rtol=1e-6)

    print("KERNEL_OK")
</pallas_src>

<mosaic_0001>
module attributes {stable_mosaic.version = 11 : i64} {
  func.func @kernel(%arg0: i32, %arg1: memref<8x256xf32, #tpu.memory_space<vmem>>, %arg2: memref<8x256xf32, #tpu.memory_space<vmem>>) attributes {dimension_semantics = [#tpu.dimension_semantics<parallel>], iteration_bounds = array<i64: 1>, scalar_prefetch = 0 : i64, scratch_operands = 0 : i64, tpu.core_type = #tpu.core_type<tc>, window_params = [{transform_indices = @transform_0, window_bounds = array<i64: 8, 256>}, {transform_indices = @transform_1, window_bounds = array<i64: 8, 256>}]} {
    %c0 = arith.constant 0 : index
    %c0_0 = arith.constant 0 : index
    %0 = vector.load %arg1[%c0, %c0_0] : memref<8x256xf32, #tpu.memory_space<vmem>>, vector<8x256xf32>
    %1 = math.tanh %0 : vector<8x256xf32>
    %c0_1 = arith.constant 0 : index
    %c0_2 = arith.constant 0 : index
    %2 = vector.load %arg2[%c0_1, %c0_2] : memref<8x256xf32, #tpu.memory_space<vmem>>, vector<8x256xf32>
    tpu.vector_store %arg2[%c0_1, %c0_2], %1 {strides = array<i32>} : memref<8x256xf32, #tpu.memory_space<vmem>>, vector<8x256xf32>,
    return
  }
  func.func @transform_0(%arg0: i32) -> (i32, i32) {
    %c0_i32 = arith.constant 0 : i32
    %c0_i32_0 = arith.constant 0 : i32
    return %arg0, %c0_i32 : i32, i32
  }
  func.func @transform_1(%arg0: i32) -> (i32, i32) {
    %c0_i32 = arith.constant 0 : i32
    %c0_i32_0 = arith.constant 0 : i32
    return %arg0, %c0_i32 : i32, i32
  }
}

</mosaic_0001>

<llo_original>
// kernel: tpu_custom_call.1
$region0: #{tpu_custom_call.1}
  #allocation0 [shape = 'u32[]', space=smem, size = 0x4, offset = 0x4, fixed_abs, tag = 'smem constant byte address 0x4 - core index']
  #allocation1 [shape = 'u32[144,128]{1,0:T(1,128)}', space=vmem, size = 0x12000, scoped, tag = 'internal scratch']
  %s0 = inlined_call_operand.hbm [shape: f32[8,256], index: 0, kind: input, shape index: {}, may-alias: {0,1}]
  %s1 = inlined_call_operand.hbm [shape: f32[8,256], index: 1, kind: output, shape index: {}, may-alias: {0,1}]
  %s2 = sld [smem:[#allocation0]]
  $region18: #{tpu_custom_call.1} parent=0
    _
  %s4 = ssub.s32 1, %s2
  %s5 = scalar_select 0, %s4, %s2
  $region1: #{tpu_custom_call.1} parent=0
    #allocation2 [shape = 'u8[8192]{0}', space=vmem, size = 0x2000, scoped, tag = 'input window, operand 0, single buffered']
    #allocation3 [shape = 's32[1]{0}', space=sflag, size = 0x4, scoped, tag = 'scoped memory for tpu_custom_call.1']
    #allocation4 [shape = 's32[1]{0}', space=sflag, size = 0x4, scoped, tag = 'scoped memory for tpu_custom_call.1']
    #allocation5 [shape = 'u8[8192]{0}', space=vmem, size = 0x2000, scoped, tag = 'output window, operand 0, single buffered']
    %6 = vsyncpa [#allocation3], 0
    %7 = vsyncpa [#allocation4], 0
    // Predicated region
    $region2: #{tpu_custom_call.1} parent=1 // pred_check
      _
    $region3: #{tpu_custom_call.1} parent=1 // pred_check_branch
      %9 = sbr.rel (0) target = $region5
    $region4: #{tpu_custom_call.1} parent=1 // pred_region
      %s11 = ssub.s32 256, 256
      %12 = vsyncadd [#allocation3], %s11
      %s14 = sshll.u32 [#allocation2], 4
      %s15 = int_to_ptr.vmem [resolvable:$true] %s14
      %17 = dma.hbm_to_vmem [thread:$0]  %s0, 256, %s15, [#allocation3]
    $region5: #{tpu_custom_call.1} parent=1 // pred_fallthru
      _
    // Predicated region
    $region6: #{tpu_custom_call.1} parent=1 // pred_check
      _
    $region7: #{tpu_custom_call.1} parent=1 // pred_check_branch
      %19 = sbr.rel (0) target = $region9
    $region8: #{tpu_custom_call.1} parent=1 // pred_region
      %20 = dma.done [#allocation3], 256
    $region9: #{tpu_custom_call.1} parent=1 // pred_fallthru
      _
    %v21 = vld [vmem:[#allocation2] sm:$0xff]
    %v22 = vld [vmem:[#allocation2 + $0x8] sm:$0xff]
    %v23 = vtanh.pop %v21
    %v24 = vtanh.pop %v22
    %25 = vst [vmem:[#allocation5] sm:$0xff] %v23
    %26 = vst [vmem:[#allocation5 + $0x8] sm:$0xff] %v24
    // Predicated region
    $region10: #{tpu_custom_call.1} parent=1 // pred_check
      _
    $region11: #{tpu_custom_call.1} parent=1 // pred_check_branch
      %28 = sbr.rel (0) target = $region13
    $region12: #{tpu_custom_call.1} parent=1 // pred_region
      %s30 = ssub.s32 256, 256
      %31 = vsyncadd [#allocation4], %s30
      %s33 = sshll.u32 [#allocation5], 4
      %s34 = int_to_ptr.vmem [resolvable:$true] %s33
      %36 = dma.vmem_to_hbm [thread:$0]  %s34, 256, %s1, [#allocation4]
    $region13: #{tpu_custom_call.1} parent=1 // pred_fallthru
      _
    // Predicated region
    $region14: #{tpu_custom_call.1} parent=1 // pred_check
      _
    $region15: #{tpu_custom_call.1} parent=1 // pred_check_branch
      %38 = sbr.rel (0) target = $region17
    $region16: #{tpu_custom_call.1} parent=1 // pred_region
      %39 = dma.done [#allocation4], 256
    $region17: #{tpu_custom_call.1} parent=1 // pred_fallthru
      _
    %40 = vsyncpa [#allocation3], 1
    %41 = vsyncpa [#allocation4], 1

</llo_original>
